<compile_context>
chip_gen: v7x
topology: tpu7x:2x2x1
jax: 0.10.0
libtpu: 0.0.40
codegen_flags: <defaults>
</compile_context>

<pallas_src>
import functools

import jax
import jax.numpy as jnp
from jax import lax
from jax.experimental import pallas as pl
from jax.experimental.pallas import tpu as pltpu


def _round_up(x, m):
    return ((x + m - 1) // m) * m


def _make_dpsh_kernel(num_train, steps_per_par, tile_n, needs_mask):
    def kernel(u_ref, y_ref, Ut_ref, Yt_ref, acc_ref):
        j = pl.program_id(1)

        @pl.when(j == 0)
        def _():
            acc_ref[...] = jnp.zeros_like(acc_ref)

        u = u_ref[...]            # (B, bit)            f32
        y = y_ref[...]            # (B, n_class)        bf16 (exact 0/1)
        Ut = Ut_ref[...]          # (bit, tile_n)       f32, lane-dense
        Yt = Yt_ref[...]          # (n_class, tile_n)   bf16, lane-dense

        # s = (y @ Y.T > 0) -- natural (M,K)x(K,N) MXU orientation, exact for 0/1 labels.
        s = (jnp.dot(y, Yt, preferred_element_type=jnp.float32) > 0.0
             ).astype(jnp.float32)                               # (B, tile_n)

        # inner_product = u @ U.T * 0.5
        ip = jnp.dot(u, Ut, preferred_element_type=jnp.float32) * 0.5

        # log(1 + exp(-|ip|)) + max(ip, 0) - s * ip   (stable softplus form)
        ll = (jnp.log(1.0 + jnp.exp(-jnp.abs(ip)))
              + jnp.maximum(ip, 0.0)
              - s * ip)                                          # (B, tile_n)

        if not needs_mask:
            acc_ref[...] += ll[None, :, :]
        else:
            start = (pl.program_id(0) * steps_per_par + j) * tile_n

            @pl.when(start + tile_n <= num_train)        # fully in-range block
            def _():
                acc_ref[...] += ll[None, :, :]

            @pl.when(start + tile_n > num_train)         # (partially) OOB tail block
            def _():
                rows = start + lax.broadcasted_iota(jnp.int32, ll.shape, 1)
                acc_ref[...] += jnp.where(rows < num_train, ll, 0.0)[None, :, :]

    return kernel


def dpsh_loss(u, y, U_t, Y_t, ind, *, alpha=0.1, tile_n=16384, n_par=1):
    """DPSHLoss.forward.

    U_t: (bit, num_train) float32 bank (transposed, persistent).
    Y_t: (n_class, num_train) bfloat16 bank (transposed, persistent).
    Returns (loss, U_t_new, Y_t_new) mirroring the module's in-place bank updates.
    Donate U_t / Y_t at the jit boundary so the scatters are in place.
    """
    u = u.astype(jnp.float32)
    y = y.astype(jnp.float32)

    # Stateful memory-bank update (tiny column scatter, in place under donation).
    U_t = U_t.at[:, ind].set(u.T)
    Y_t = Y_t.at[:, ind].set(y.T.astype(Y_t.dtype))

    B, bit = u.shape
    _, n_class = y.shape
    N = U_t.shape[1]

    # Tile geometry: big lane-dense tiles over num_train (the lane axis of the
    # transposed banks).  No bank padding: the tail block is masked in-kernel.
    n_par = max(1, int(n_par))
    tile_n = max(128, min(int(tile_n), _round_up(pl.cdiv(N, n_par), 128)))
    tile_n = _round_up(tile_n, 128)
    total_blocks = pl.cdiv(N, tile_n)
    steps_per_par = pl.cdiv(total_blocks, n_par)
    needs_mask = (n_par * steps_per_par * tile_n) > N
    last_block = total_blocks - 1

    y_k = y.astype(jnp.bfloat16)   # tiny; 0/1 labels are exact in bf16

    kernel = _make_dpsh_kernel(int(N), int(steps_per_par), int(tile_n),
                               bool(needs_mask))

    def bank_map(p, j):
        gb = p * steps_per_par + j
        if needs_mask:
            # Fully out-of-range blocks (possible when n_par does not divide the
            # block count) are clamped onto the last valid block; the in-kernel
            # mask zeroes their contribution.
            gb = jnp.minimum(gb, last_block)
        return (0, gb)

    in_specs = [
        pl.BlockSpec((B, bit), lambda p, j: (0, 0)),
        pl.BlockSpec((B, n_class), lambda p, j: (0, 0)),
        pl.BlockSpec((bit, tile_n), bank_map),
        pl.BlockSpec((n_class, tile_n), bank_map),
    ]
    out_specs = pl.BlockSpec((1, B, tile_n), lambda p, j: (p, 0, 0))

    # VMEM budget: lane-dense blocks, double-buffered inputs + resident output.
    vmem_est = (2 * bit * tile_n * 4
                + 2 * n_class * tile_n * 2
                + 2 * B * tile_n * 4
                + 4 * B * (bit * 4 + n_class * 2))
    vmem_limit = int(min(max(2 * vmem_est, 16 * 2**20), 64 * 2**20))

    coverage = n_par * steps_per_par * tile_n
    cost = pl.CostEstimate(
        flops=2 * B * coverage * (bit + n_class),
        transcendentals=2 * B * coverage,
        bytes_accessed=(N * bit * 4 + N * n_class * 2
                        + B * (bit * 4 + n_class * 2)
                        + n_par * B * tile_n * 4),
    )

    partial = pl.pallas_call(
        kernel,
        out_shape=jax.ShapeDtypeStruct((n_par, B, tile_n), jnp.float32),
        grid_spec=pltpu.PrefetchScalarGridSpec(
            num_scalar_prefetch=0,
            grid=(n_par, steps_per_par),
            in_specs=in_specs,
            out_specs=out_specs,
        ),
        compiler_params=pltpu.CompilerParams(
            dimension_semantics=("parallel", "arbitrary"),
            vmem_limit_bytes=vmem_limit),
        cost_estimate=cost,
    )(u, y_k, U_t, Y_t)

    # Final tiny reductions in plain JAX (combines the per-core partials).
    likelihood_loss = jnp.sum(partial) / jnp.float32(B * N)
    quantization_loss = jnp.float32(alpha) * jnp.mean((u - jnp.sign(u)) ** 2)
    return likelihood_loss + quantization_loss, U_t, Y_t


def dpsh_loss_ref(u, y, U, Y, ind, alpha=0.1):
    """Pure-JAX reference matching the PyTorch forward (standard layout, f32)."""
    u = u.astype(jnp.float32)
    y = y.astype(jnp.float32)
    U = U.at[ind].set(u)
    Y = Y.at[ind].set(y)
    s = (y @ Y.T > 0).astype(jnp.float32)
    ip = u @ U.T * 0.5
    ll = jnp.log(1.0 + jnp.exp(-jnp.abs(ip))) + jnp.maximum(ip, 0.0) - s * ip
    quant = alpha * jnp.mean((u - jnp.sign(u)) ** 2)
    return ll.mean() + quant


if __name__ == "__main__":
    # Small, DPSH-consistent shapes. num_train deliberately NOT a multiple of
    # 128 so the unpadded tail-mask path is exercised.
    B = 8            # batch
    bit = 32         # hash bits
    n_class = 16     # label dimension
    num_train = 1000 # memory bank rows
    alpha = 0.1

    key = jax.random.PRNGKey(0)
    k_u, k_y, k_ind = jax.random.split(key, 3)

    u = jax.random.normal(k_u, (B, bit), dtype=jnp.float32)
    y = (jax.random.uniform(k_y, (B, n_class)) > 0.7).astype(jnp.float32)  # multi-hot
    ind = jax.random.permutation(k_ind, num_train)[:B]

    # Module __init__: zero-initialized memory banks, stored transposed
    # (lane-dense) with the label bank persistently in bf16 (0/1 exact).
    U_t0 = jnp.zeros((bit, num_train), dtype=jnp.float32)
    Y_t0 = jnp.zeros((n_class, num_train), dtype=jnp.bfloat16)

    # 2 TensorCores only on v7x; an extra parallel slice is pure overhead elsewhere.
    try:
        n_par = 2 if "v7" in jax.devices()[0].device_kind.lower() else 1
    except Exception:
        n_par = 1

    step = jax.jit(
        functools.partial(dpsh_loss, alpha=alpha, tile_n=16384, n_par=n_par),
        donate_argnums=(2, 3),   # banks updated in place (no full-bank copy per call)
    )

    loss, U_t1, Y_t1 = step(u, y, U_t0, Y_t0, ind)
    loss = jax.block_until_ready(loss)

    loss_ref = jax.block_until_ready(
        dpsh_loss_ref(u, y,
                      jnp.zeros((num_train, bit), jnp.float32),
                      jnp.zeros((num_train, n_class), jnp.float32),
                      ind, alpha=alpha))

    assert jnp.allclose(loss, loss_ref, rtol=1e-5, atol=1e-5), (loss, loss_ref)
    print("KERNEL_OK")
</pallas_src>

<mosaic_0001>
module attributes {stable_mosaic.version = 11 : i64} {
  func.func @kernel(%arg0: i32, %arg1: i32, %arg2: memref<8x32xf32, #tpu.memory_space<vmem>>, %arg3: memref<8x16xbf16, #tpu.memory_space<vmem>>, %arg4: memref<32x1024xf32, #tpu.memory_space<vmem>>, %arg5: memref<16x1024xbf16, #tpu.memory_space<vmem>>, %arg6: memref<1x8x1024xf32, #tpu.memory_space<vmem>>) attributes {dimension_semantics = [#tpu.dimension_semantics<parallel>, #tpu.dimension_semantics<arbitrary>], iteration_bounds = array<i64: 1, 1>, scalar_prefetch = 0 : i64, scratch_operands = 0 : i64, tpu.core_type = #tpu.core_type<tc>, window_params = [{pipeline_mode = #tpu.pipeline_mode<synchronous>, transform_indices = @transform_0, window_bounds = array<i64: 8, 32>}, {pipeline_mode = #tpu.pipeline_mode<synchronous>, transform_indices = @transform_1, window_bounds = array<i64: 8, 16>}, {transform_indices = @transform_2, window_bounds = array<i64: 32, 1024>}, {transform_indices = @transform_3, window_bounds = array<i64: 16, 1024>}, {transform_indices = @transform_4, window_bounds = array<i64: 1, 8, 1024>}]} {
    %c0_i32 = arith.constant 0 : i32
    %0 = arith.cmpi eq, %arg1, %c0_i32 : i32
    %1 = arith.extui %0 : i1 to i32
    %c0_i32_0 = arith.constant 0 : i32
    %2 = arith.cmpi ne, %1, %c0_i32_0 : i32
    scf.if %2 {
      %cst_19 = arith.constant 0.000000e+00 : f32
      %38 = vector.broadcast %cst_19 : f32 to vector<1x8x1024xf32>
      %c0_20 = arith.constant 0 : index
      %c0_21 = arith.constant 0 : index
      %c0_22 = arith.constant 0 : index
      %39 = vector.load %arg6[%c0_20, %c0_21, %c0_22] : memref<1x8x1024xf32, #tpu.memory_space<vmem>>, vector<1x8x1024xf32>
      tpu.vector_store %arg6[%c0_20, %c0_21, %c0_22], %38 {strides = array<i32>} : memref<1x8x1024xf32, #tpu.memory_space<vmem>>, vector<1x8x1024xf32>,
    } else {
    }
    %c0 = arith.constant 0 : index
    %c0_1 = arith.constant 0 : index
    %3 = vector.load %arg2[%c0, %c0_1] : memref<8x32xf32, #tpu.memory_space<vmem>>, vector<8x32xf32>
    %c0_2 = arith.constant 0 : index
    %c0_3 = arith.constant 0 : index
    %4 = vector.load %arg3[%c0_2, %c0_3] : memref<8x16xbf16, #tpu.memory_space<vmem>>, vector<8x16xbf16>
    %c0_4 = arith.constant 0 : index
    %c0_5 = arith.constant 0 : index
    %5 = vector.load %arg4[%c0_4, %c0_5] : memref<32x1024xf32, #tpu.memory_space<vmem>>, vector<32x1024xf32>
    %c0_6 = arith.constant 0 : index
    %c0_7 = arith.constant 0 : index
    %6 = vector.load %arg5[%c0_6, %c0_7] : memref<16x1024xbf16, #tpu.memory_space<vmem>>, vector<16x1024xbf16>
    %cst = arith.constant dense<0.000000e+00> : vector<8x1024xf32>
    %7 = tpu.matmul %4, %6, %cst {dimension_numbers = #tpu.dot_dimension_numbers<[1], [0], [0], [1], [0, 0, 1, 1], [], []>} : vector<8x16xbf16>, vector<16x1024xbf16>, vector<8x1024xf32> -> vector<8x1024xf32>
    %cst_8 = arith.constant 0.000000e+00 : f32
    %8 = vector.broadcast %cst_8 : f32 to vector<8x1024xf32>
    %9 = arith.cmpf ogt, %7, %8 : vector<8x1024xf32>
    %10 = arith.extui %9 : vector<8x1024xi1> to vector<8x1024xi32>
    %11 = arith.sitofp %10 : vector<8x1024xi32> to vector<8x1024xf32>
    %cst_9 = arith.constant dense<0.000000e+00> : vector<8x1024xf32>
    %12 = tpu.matmul %3, %5, %cst_9 {dimension_numbers = #tpu.dot_dimension_numbers<[1], [0], [0], [1], [0, 0, 1, 1], [], []>} : vector<8x32xf32>, vector<32x1024xf32>, vector<8x1024xf32> -> vector<8x1024xf32>
    %cst_10 = arith.constant 5.000000e-01 : f32
    %13 = vector.broadcast %cst_10 : f32 to vector<8x1024xf32>
    %14 = arith.mulf %12, %13 : vector<8x1024xf32>
    %15 = math.absf %14 : vector<8x1024xf32>
    %cst_11 = arith.constant 0.000000e+00 : f32
    %16 = vector.broadcast %cst_11 : f32 to vector<8x1024xf32>
    %17 = arith.subf %16, %15 : vector<8x1024xf32>
    %18 = math.exp %17 : vector<8x1024xf32>
    %cst_12 = arith.constant 1.000000e+00 : f32
    %19 = vector.broadcast %cst_12 : f32 to vector<8x1024xf32>
    %20 = arith.addf %19, %18 : vector<8x1024xf32>
    %21 = math.log %20 : vector<8x1024xf32>
    %cst_13 = arith.constant 0.000000e+00 : f32
    %22 = vector.broadcast %cst_13 : f32 to vector<8x1024xf32>
    %23 = arith.maximumf %14, %22 : vector<8x1024xf32>
    %24 = arith.addf %21, %23 : vector<8x1024xf32>
    %25 = arith.mulf %11, %14 : vector<8x1024xf32>
    %26 = arith.subf %24, %25 : vector<8x1024xf32>
    %c1_i32 = arith.constant 1 : i32
    %27 = arith.muli %arg0, %c1_i32 : i32
    %28 = arith.addi %27, %arg1 : i32
    %c1024_i32 = arith.constant 1024 : i32
    %29 = arith.muli %28, %c1024_i32 : i32
    %c1024_i32_14 = arith.constant 1024 : i32
    %30 = arith.addi %29, %c1024_i32_14 : i32
    %c1000_i32 = arith.constant 1000 : i32
    %31 = arith.cmpi sle, %30, %c1000_i32 : i32
    %32 = arith.extui %31 : i1 to i32
    %c0_i32_15 = arith.constant 0 : i32
    %33 = arith.cmpi ne, %32, %c0_i32_15 : i32
    scf.if %33 {
      %c0_19 = arith.constant 0 : index
      %c0_20 = arith.constant 0 : index
      %c0_21 = arith.constant 0 : index
      %38 = vector.load %arg6[%c0_19, %c0_20, %c0_21] : memref<1x8x1024xf32, #tpu.memory_space<vmem>>, vector<1x8x1024xf32>
      %39 = vector.shape_cast %26 : vector<8x1024xf32> to vector<1x8x1024xf32>
      %40 = arith.addf %38, %39 : vector<1x8x1024xf32>
      %c0_22 = arith.constant 0 : index
      %c0_23 = arith.constant 0 : index
      %c0_24 = arith.constant 0 : index
      %41 = vector.load %arg6[%c0_22, %c0_23, %c0_24] : memref<1x8x1024xf32, #tpu.memory_space<vmem>>, vector<1x8x1024xf32>
      tpu.vector_store %arg6[%c0_22, %c0_23, %c0_24], %40 {strides = array<i32>} : memref<1x8x1024xf32, #tpu.memory_space<vmem>>, vector<1x8x1024xf32>,
    } else {
    }
    %c1024_i32_16 = arith.constant 1024 : i32
    %34 = arith.addi %29, %c1024_i32_16 : i32
    %c1000_i32_17 = arith.constant 1000 : i32
    %35 = arith.cmpi sgt, %34, %c1000_i32_17 : i32
    %36 = arith.extui %35 : i1 to i32
    %c0_i32_18 = arith.constant 0 : i32
    %37 = arith.cmpi ne, %36, %c0_i32_18 : i32
    scf.if %37 {
      %38 = tpu.iota {dimensions = array<i32: 1>} : vector<8x1024xi32>
      %39 = vector.broadcast %29 : i32 to vector<8x1024xi32>
      %40 = arith.addi %39, %38 : vector<8x1024xi32>
      %c0_19 = arith.constant 0 : index
      %c0_20 = arith.constant 0 : index
      %c0_21 = arith.constant 0 : index
      %41 = vector.load %arg6[%c0_19, %c0_20, %c0_21] : memref<1x8x1024xf32, #tpu.memory_space<vmem>>, vector<1x8x1024xf32>
      %c1000_i32_22 = arith.constant 1000 : i32
      %42 = vector.broadcast %c1000_i32_22 : i32 to vector<8x1024xi32>
      %43 = arith.cmpi slt, %40, %42 : vector<8x1024xi32>
      %cst_23 = arith.constant 0.000000e+00 : f32
      %44 = vector.broadcast %cst_23 : f32 to vector<8x1024xf32>
      %45 = arith.select %43, %26, %44 : vector<8x1024xi1>, vector<8x1024xf32>
      %46 = vector.shape_cast %45 : vector<8x1024xf32> to vector<1x8x1024xf32>
      %47 = arith.addf %41, %46 : vector<1x8x1024xf32>
      %c0_24 = arith.constant 0 : index
      %c0_25 = arith.constant 0 : index
      %c0_26 = arith.constant 0 : index
      %48 = vector.load %arg6[%c0_24, %c0_25, %c0_26] : memref<1x8x1024xf32, #tpu.memory_space<vmem>>, vector<1x8x1024xf32>
      tpu.vector_store %arg6[%c0_24, %c0_25, %c0_26], %47 {strides = array<i32>} : memref<1x8x1024xf32, #tpu.memory_space<vmem>>, vector<1x8x1024xf32>,
    } else {
    }
    return
  }
  func.func @transform_0(%arg0: i32, %arg1: i32) -> (i32, i32) {
    %c0_i32 = arith.constant 0 : i32
    %c0_i32_0 = arith.constant 0 : i32
    %c0_i32_1 = arith.constant 0 : i32
    return %c0_i32, %c0_i32_0 : i32, i32
  }
  func.func @transform_1(%arg0: i32, %arg1: i32) -> (i32, i32) {
    %c0_i32 = arith.constant 0 : i32
    %c0_i32_0 = arith.constant 0 : i32
    %c0_i32_1 = arith.constant 0 : i32
    return %c0_i32, %c0_i32_0 : i32, i32
  }
  func.func @transform_2(%arg0: i32, %arg1: i32) -> (i32, i32) {
    %c1_i32 = arith.constant 1 : i32
    %0 = arith.muli %arg0, %c1_i32 : i32
    %1 = arith.addi %0, %arg1 : i32
    %c0_i32 = arith.constant 0 : i32
    %2 = arith.minsi %1, %c0_i32 : i32
    %c0_i32_0 = arith.constant 0 : i32
    %c0_i32_1 = arith.constant 0 : i32
    return %c0_i32_0, %2 : i32, i32
  }
  func.func @transform_3(%arg0: i32, %arg1: i32) -> (i32, i32) {
    %c1_i32 = arith.constant 1 : i32
    %0 = arith.muli %arg0, %c1_i32 : i32
    %1 = arith.addi %0, %arg1 : i32
    %c0_i32 = arith.constant 0 : i32
    %2 = arith.minsi %1, %c0_i32 : i32
    %c0_i32_0 = arith.constant 0 : i32
    %c0_i32_1 = arith.constant 0 : i32
    return %c0_i32_0, %2 : i32, i32
  }
  func.func @transform_4(%arg0: i32, %arg1: i32) -> (i32, i32, i32) {
    %c0_i32 = arith.constant 0 : i32
    %c0_i32_0 = arith.constant 0 : i32
    %c0_i32_1 = arith.constant 0 : i32
    return %arg0, %c0_i32, %c0_i32_0 : i32, i32, i32
  }
}

</mosaic_0001>

<llo_original>
// kernel: dpsh_loss.1
$region0: #{dpsh_loss.1}
  #allocation0 [shape = 'u32[]', space=smem, size = 0x4, offset = 0x4, fixed_abs, tag = 'smem constant byte address 0x4 - core index']
  #allocation1 [shape = 'u32[144,128]{1,0:T(1,128)}', space=vmem, size = 0x12000, scoped, tag = 'internal scratch']
  %s0 = inlined_call_operand.vmem [shape: f32[8,32], index: 0, kind: input, shape index: {}]
  %s1 = inlined_call_operand.vmem [shape: bf16[8,16], index: 1, kind: input, shape index: {}]
  %s2 = inlined_call_operand.vmem [shape: f32[32,1000], index: 2, kind: input, shape index: {}]
  %s3 = inlined_call_operand.vmem [shape: bf16[16,1000], index: 3, kind: input, shape index: {}]
  %s4 = inlined_call_operand.vmem [shape: f32[1,8,1024], index: 4, kind: output, shape index: {}]
  %s5 = sld [smem:[#allocation0]]
  $region38: #{dpsh_loss.1} parent=0
    _
  %s7 = ssub.s32 1, %s5
  %s8 = scalar_select 0, %s7, %s5
  // Predicated region
  $region2: #{dpsh_loss.1} parent=0 // pred_check
    _
  $region3: #{dpsh_loss.1} parent=0 // pred_check_branch
    %10 = sbr.rel (0) target = $region5
  $region4: #{dpsh_loss.1} parent=0 // pred_region
    _
  $region5: #{dpsh_loss.1} parent=0 // pred_fallthru
    _
  // Predicated region
  $region6: #{dpsh_loss.1} parent=0 // pred_check
    _
  $region7: #{dpsh_loss.1} parent=0 // pred_check_branch
    %12 = sbr.rel (0) target = $region9
  $region8: #{dpsh_loss.1} parent=0 // pred_region
    _
  $region9: #{dpsh_loss.1} parent=0 // pred_fallthru
    _
  // Predicated region
  $region10: #{dpsh_loss.1} parent=0 // pred_check
    _
  $region11: #{dpsh_loss.1} parent=0 // pred_check_branch
    %14 = sbr.rel (0) target = $region13
  $region12: #{dpsh_loss.1} parent=0 // pred_region
    %s15 = sadd.s32 0, 0
    %p16 = scmp.lt.s32.totalorder %s15, 0
    %s17 = scalar_select %p16, %s15, 0
    %s18 = smul.u32 8, %s17
    %p19 = scmp.lt.s32.totalorder %s18, 7
    %s20 = scalar_select %p19, %s18, 7
    %s21 = smul.addr %s20, 8
    %s22 = scalar_lea.vmem %s2, %s21
    %s23 = sadd.s32 0, 0
    %p24 = scmp.lt.s32.totalorder %s23, 0
    %s25 = scalar_select %p24, %s23, 0
    %s26 = smul.u32 8, %s25
  $region13: #{dpsh_loss.1} parent=0 // pred_fallthru
    _
  // Predicated region
  $region14: #{dpsh_loss.1} parent=0 // pred_check
    _
  $region15: #{dpsh_loss.1} parent=0 // pred_check_branch
    %28 = sbr.rel (0) target = $region17
  $region16: #{dpsh_loss.1} parent=0 // pred_region
    %s29 = sadd.s32 0, 0
    %p30 = scmp.lt.s32.totalorder %s29, 0
    %s31 = scalar_select %p30, %s29, 0
    %s32 = smul.u32 8, %s31
    %p33 = scmp.lt.s32.totalorder %s32, 7
    %s34 = scalar_select %p33, %s32, 7
    %s35 = smul.addr %s34, 4
    %s36 = scalar_lea.vmem %s3, %s35
    %s37 = sadd.s32 0, 0
    %p38 = scmp.lt.s32.totalorder %s37, 0
    %s39 = scalar_select %p38, %s37, 0
    %s40 = smul.u32 8, %s39
  $region17: #{dpsh_loss.1} parent=0 // pred_fallthru
    _
  %s41 = sadd.s32 0, 0
  %p42 = scmp.lt.s32.totalorder %s41, 0
  %s43 = scalar_select %p42, %s41, 0
  %s44 = smul.u32 8, %s43
  %p45 = scmp.lt.s32.totalorder %s44, 7
  %s46 = scalar_select %p45, %s44, 7
  %s47 = smul.addr %s46, 8
  %s48 = scalar_lea.vmem %s2, %s47
  %s49 = sadd.s32 0, 0
  %p50 = scmp.lt.s32.totalorder %s49, 0
  %s51 = scalar_select %p50, %s49, 0
  %s52 = smul.u32 8, %s51
  %p53 = scmp.lt.s32.totalorder %s52, 7
  %s54 = scalar_select %p53, %s52, 7
  %s55 = smul.addr %s54, 4
  %s56 = scalar_lea.vmem %s3, %s55
  %s57 = sadd.s32 0, 0
  %p58 = scmp.lt.s32.totalorder %s57, 0
  %s59 = scalar_select %p58, %s57, 0
  %s60 = smul.u32 8, %s59
  %p61 = scmp.lt.s32.totalorder %s60, 7
  %s62 = scalar_select %p61, %s60, 7
  %s63 = smul.addr %s62, 8
  %s64 = scalar_lea.vmem %s2, %s63
  %s65 = sadd.s32 0, 0
  %p66 = scmp.lt.s32.totalorder %s65, 0
  %s67 = scalar_select %p66, %s65, 0
  %s68 = smul.u32 8, %s67
  %s69 = sadd.s32 0, 0
  %p70 = scmp.lt.s32.totalorder %s69, 0
  %s71 = scalar_select %p70, %s69, 0
  %s72 = smul.u32 8, %s71
  %p73 = scmp.lt.s32.totalorder %s72, 7
  %s74 = scalar_select %p73, %s72, 7
  %s75 = smul.addr %s74, 4
  %s76 = scalar_lea.vmem %s3, %s75
  %s77 = sadd.s32 0, 0
  %p78 = scmp.lt.s32.totalorder %s77, 0
  %s79 = scalar_select %p78, %s77, 0
  %s80 = smul.u32 8, %s79
  %p82 = scmp.eq.s32.totalorder 0, 0
  // Predicated region
  $region18: #{dpsh_loss.1} parent=0 // pred_check
    %p83 = pneg %p82
  $region19: #{dpsh_loss.1} parent=0 // pred_check_branch
    %85 = sbr.rel (%p83) target = $region21
  $region20: #{dpsh_loss.1} parent=0 // pred_region
    %86 = vst [vmem:[%s4] sm:$0xff] 0.0
    %87 = vst [vmem:[%s4 + $0x8] sm:$0xff] 0.0
    %88 = vst [vmem:[%s4 + $0x10] sm:$0xff] 0.0
    %89 = vst [vmem:[%s4 + $0x18] sm:$0xff] 0.0
    %90 = vst [vmem:[%s4 + $0x20] sm:$0xff] 0.0
    %91 = vst [vmem:[%s4 + $0x28] sm:$0xff] 0.0
    %92 = vst [vmem:[%s4 + $0x30] sm:$0xff] 0.0
    %93 = vst [vmem:[%s4 + $0x38] sm:$0xff] 0.0
  $region21: #{dpsh_loss.1} parent=0 // pred_fallthru
    _
  %v94 = vld [vmem:[%s0] sm:$0xff]
  %v95 = vld [vmem:[%s1] sm:$0xf]
  %v96 = vld [vmem:[%s64] sm:$0xff]
  %v97 = vld [vmem:[%s64 + $0x8] sm:$0xff]
  %v98 = vld [vmem:[%s64 + $0x10] sm:$0xff]
  %v99 = vld [vmem:[%s64 + $0x18] sm:$0xff]
  %v100 = vld [vmem:[%s64 + $0x20] sm:$0xff]
  %v101 = vld [vmem:[%s64 + $0x28] sm:$0xff]
  %v102 = vld [vmem:[%s64 + $0x30] sm:$0xff]
  %v103 = vld [vmem:[%s64 + $0x38] sm:$0xff]
  %v104 = vld [vmem:[%s64 + $0x40] sm:$0xff]
  %v105 = vld [vmem:[%s64 + $0x48] sm:$0xff]
  %v106 = vld [vmem:[%s64 + $0x50] sm:$0xff]
  %v107 = vld [vmem:[%s64 + $0x58] sm:$0xff]
  %v108 = vld [vmem:[%s64 + $0x60] sm:$0xff]
  %v109 = vld [vmem:[%s64 + $0x68] sm:$0xff]
  %v110 = vld [vmem:[%s64 + $0x70] sm:$0xff]
  %v111 = vld [vmem:[%s64 + $0x78] sm:$0xff]
  %v112 = vld [vmem:[%s64 + $0x80] sm:$0xff]
  %v113 = vld [vmem:[%s64 + $0x88] sm:$0xff]
  %v114 = vld [vmem:[%s64 + $0x90] sm:$0xff]
  %v115 = vld [vmem:[%s64 + $0x98] sm:$0xff]
  %v116 = vld [vmem:[%s64 + $0xa0] sm:$0xff]
  %v117 = vld [vmem:[%s64 + $0xa8] sm:$0xff]
  %v118 = vld [vmem:[%s64 + $0xb0] sm:$0xff]
  %v119 = vld [vmem:[%s64 + $0xb8] sm:$0xff]
  %v120 = vld [vmem:[%s64 + $0xc0] sm:$0xff]
  %v121 = vld [vmem:[%s64 + $0xc8] sm:$0xff]
  %v122 = vld [vmem:[%s64 + $0xd0] sm:$0xff]
  %v123 = vld [vmem:[%s64 + $0xd8] sm:$0xff]
  %v124 = vld [vmem:[%s64 + $0xe0] sm:$0xff]
  %v125 = vld [vmem:[%s64 + $0xe8] sm:$0xff]
  %v126 = vld [vmem:[%s64 + $0xf0] sm:$0xff]
  %v127 = vld [vmem:[%s64 + $0xf8] sm:$0xff]
  %v128 = vld [vmem:[%s76] sm:$0xff]
  %v129 = vld [vmem:[%s76 + $0x8] sm:$0xff]
  %v130 = vld [vmem:[%s76 + $0x10] sm:$0xff]
  %v131 = vld [vmem:[%s76 + $0x18] sm:$0xff]
  %v132 = vld [vmem:[%s76 + $0x20] sm:$0xff]
  %v133 = vld [vmem:[%s76 + $0x28] sm:$0xff]
  %v134 = vld [vmem:[%s76 + $0x30] sm:$0xff]
  %v135 = vld [vmem:[%s76 + $0x38] sm:$0xff]
  %v144 = vunpack.c.l.b16 %v128
  %v145 = vunpack.c.h.b16 %v128
  %v146 = vunpack.c.l.b16 %v129
  %v147 = vunpack.c.h.b16 %v129
  %v148 = vunpack.c.l.b16 %v130
  %v149 = vunpack.c.h.b16 %v130
  %v150 = vunpack.c.l.b16 %v131
  %v151 = vunpack.c.h.b16 %v131
  %v152 = vunpack.c.l.b16 %v132
  %v153 = vunpack.c.h.b16 %v132
  %v154 = vunpack.c.l.b16 %v133
  %v155 = vunpack.c.h.b16 %v133
  %v156 = vunpack.c.l.b16 %v134
  %v157 = vunpack.c.h.b16 %v134
  %v158 = vunpack.c.l.b16 %v135
  %v159 = vunpack.c.h.b16 %v135
  %v160 = vpack.c.b16 %v152, %v144
  %v161 = vpack.c.b16 %v153, %v145
  %v162 = vpack.c.b16 %v154, %v146
  %v163 = vpack.c.b16 %v155, %v147
  %v164 = vpack.c.b16 %v156, %v148
  %v165 = vpack.c.b16 %v157, %v149
  %v166 = vpack.c.b16 %v158, %v150
  %v167 = vpack.c.b16 %v159, %v151
  %vm176 = vcmask 130048
  %v178 = vsel %vm176, %v95, 0
  %180 = vmatprep.subr.bf16.mxu0 %v161
  %181 = vmatpush1.bf16.msra.mxu0 %v160
  %182 = vmatprep.subr.bf16.mxu0 0
  %183 = vmatpush1.bf16.msra.mxu0 0
  %184 = vmatprep.subr.bf16.mxu0 0
  %185 = vmatpush1.bf16.msra.mxu0 0
  %186 = vmatprep.subr.bf16.mxu0 0
  %187 = vmatpush1.bf16.msra.mxu0 0
  %188 = vmatprep.subr.bf16.mxu0 0
  %189 = vmatpush1.bf16.msra.mxu0 0
  %190 = vmatprep.subr.bf16.mxu0 0
  %191 = vmatpush1.bf16.msra.mxu0 0
  %192 = vmatprep.subr.bf16.mxu0 0
  %193 = vmatpush1.bf16.msra.mxu0 0
  %194 = vmatprep.subr.bf16.mxu0 0
  %195 = vmatpush1.bf16.msra.mxu0 0
  %196 = vmatprep.subr.bf16.mxu0 0
  %197 = vmatpush1.bf16.msra.mxu0 0
  %198 = vmatprep.subr.bf16.mxu0 0
  %199 = vmatpush1.bf16.msra.mxu0 0
  %200 = vmatprep.subr.bf16.mxu0 0
  %201 = vmatpush1.bf16.msra.mxu0 0
  %202 = vmatprep.subr.bf16.mxu0 0
  %203 = vmatpush1.bf16.msra.mxu0 0
  %204 = vmatprep.subr.bf16.mxu0 0
  %205 = vmatpush1.bf16.msra.mxu0 0
  %206 = vmatprep.subr.bf16.mxu0 0
  %207 = vmatpush1.bf16.msra.mxu0 0
  %208 = vmatprep.subr.bf16.mxu0 0
  %209 = vmatpush1.bf16.msra.mxu0 0
  %210 = vmatprep.subr.bf16.mxu0 0
  %211 = vmatpush1.bf16.msra.mxu0 0
  %212 = vmatprep.mubr.bf16.mxu0 0
  %213 = vmatmul.mubr.bf16.gmra.mrb[0].mxu0 %v178
  %v214 = vpop.f32.mrb[0].mxu0
  %v215 = vadd.f32 0.0, %v214
  %v216 = vpop.f32.mrb[0].mxu0
  %v217 = vadd.f32 0.0, %v216
  %v218 = vpop.f32.mrb[0].mxu0
  %v219 = vpop.f32.mrb[0].mxu0
  %220 = vdwg.mxu0
  %221 = vmatprep.subr.bf16.mxu0 %v163
  %222 = vmatpush1.bf16.msra.mxu0 %v162
  %223 = vmatprep.subr.bf16.mxu0 0
  %224 = vmatpush1.bf16.msra.mxu0 0
  %225 = vmatprep.subr.bf16.mxu0 0
  %226 = vmatpush1.bf16.msra.mxu0 0
  %227 = vmatprep.subr.bf16.mxu0 0
  %228 = vmatpush1.bf16.msra.mxu0 0
  %229 = vmatprep.subr.bf16.mxu0 0
  %230 = vmatpush1.bf16.msra.mxu0 0
  %231 = vmatprep.subr.bf16.mxu0 0
  %232 = vmatpush1.bf16.msra.mxu0 0
  %233 = vmatprep.subr.bf16.mxu0 0
  %234 = vmatpush1.bf16.msra.mxu0 0
  %235 = vmatprep.subr.bf16.mxu0 0
  %236 = vmatpush1.bf16.msra.mxu0 0
  %237 = vmatprep.subr.bf16.mxu0 0
  %238 = vmatpush1.bf16.msra.mxu0 0
  %239 = vmatprep.subr.bf16.mxu0 0
  %240 = vmatpush1.bf16.msra.mxu0 0
  %241 = vmatprep.subr.bf16.mxu0 0
  %242 = vmatpush1.bf16.msra.mxu0 0
  %243 = vmatprep.subr.bf16.mxu0 0
  %244 = vmatpush1.bf16.msra.mxu0 0
  %245 = vmatprep.subr.bf16.mxu0 0
  %246 = vmatpush1.bf16.msra.mxu0 0
  %247 = vmatprep.subr.bf16.mxu0 0
  %248 = vmatpush1.bf16.msra.mxu0 0
  %249 = vmatprep.subr.bf16.mxu0 0
  %250 = vmatpush1.bf16.msra.mxu0 0
  %251 = vmatprep.subr.bf16.mxu0 0
  %252 = vmatpush1.bf16.msra.mxu0 0
  %253 = vmatprep.mubr.bf16.mxu0 0
  %254 = vmatmul.mubr.bf16.gmra.mrb[0].mxu0 %v178
  %v255 = vpop.f32.mrb[0].mxu0
  %v256 = vadd.f32 0.0, %v255
  %v257 = vpop.f32.mrb[0].mxu0
  %v258 = vadd.f32 0.0, %v257
  %v259 = vpop.f32.mrb[0].mxu0
  %v260 = vpop.f32.mrb[0].mxu0
  %261 = vdwg.mxu0
  %262 = vmatprep.subr.bf16.mxu0 %v165
  %263 = vmatpush1.bf16.msra.mxu0 %v164
  %264 = vmatprep.subr.bf16.mxu0 0
  %265 = vmatpush1.bf16.msra.mxu0 0
  %266 = vmatprep.subr.bf16.mxu0 0
  %267 = vmatpush1.bf16.msra.mxu0 0
  %268 = vmatprep.subr.bf16.mxu0 0
  %269 = vmatpush1.bf16.msra.mxu0 0
  %270 = vmatprep.subr.bf16.mxu0 0
  %271 = vmatpush1.bf16.msra.mxu0 0
  %272 = vmatprep.subr.bf16.mxu0 0
  %273 = vmatpush1.bf16.msra.mxu0 0
  %274 = vmatprep.subr.bf16.mxu0 0
  %275 = vmatpush1.bf16.msra.mxu0 0
  %276 = vmatprep.subr.bf16.mxu0 0
  %277 = vmatpush1.bf16.msra.mxu0 0
  %278 = vmatprep.subr.bf16.mxu0 0
  %279 = vmatpush1.bf16.msra.mxu0 0
  %280 = vmatprep.subr.bf16.mxu0 0
  %281 = vmatpush1.bf16.msra.mxu0 0
  %282 = vmatprep.subr.bf16.mxu0 0
  %283 = vmatpush1.bf16.msra.mxu0 0
  %284 = vmatprep.subr.bf16.mxu0 0
  %285 = vmatpush1.bf16.msra.mxu0 0
  %286 = vmatprep.subr.bf16.mxu0 0
  %287 = vmatpush1.bf16.msra.mxu0 0
  %288 = vmatprep.subr.bf16.mxu0 0
  %289 = vmatpush1.bf16.msra.mxu0 0
  %290 = vmatprep.subr.bf16.mxu0 0
  %291 = vmatpush1.bf16.msra.mxu0 0
  %292 = vmatprep.subr.bf16.mxu0 0
  %293 = vmatpush1.bf16.msra.mxu0 0
  %294 = vmatprep.mubr.bf16.mxu0 0
  %295 = vmatmul.mubr.bf16.gmra.mrb[0].mxu0 %v178
  %v296 = vpop.f32.mrb[0].mxu0
  %v297 = vadd.f32 0.0, %v296
  %v298 = vpop.f32.mrb[0].mxu0
  %v299 = vadd.f32 0.0, %v298
  %v300 = vpop.f32.mrb[0].mxu0
  %v301 = vpop.f32.mrb[0].mxu0
  %302 = vdwg.mxu0
  %303 = vmatprep.subr.bf16.mxu0 %v167
  %304 = vmatpush1.bf16.msra.mxu0 %v166
  %305 = vmatprep.subr.bf16.mxu0 0
  %306 = vmatpush1.bf16.msra.mxu0 0
  %307 = vmatprep.subr.bf16.mxu0 0
  %308 = vmatpush1.bf16.msra.mxu0 0
  %309 = vmatprep.subr.bf16.mxu0 0
  %310 = vmatpush1.bf16.msra.mxu0 0
  %311 = vmatprep.subr.bf16.mxu0 0
  %312 = vmatpush1.bf16.msra.mxu0 0
  %313 = vmatprep.subr.bf16.mxu0 0
  %314 = vmatpush1.bf16.msra.mxu0 0
  %315 = vmatprep.subr.bf16.mxu0 0
  %316 = vmatpush1.bf16.msra.mxu0 0
  %317 = vmatprep.subr.bf16.mxu0 0
  %318 = vmatpush1.bf16.msra.mxu0 0
  %319 = vmatprep.subr.bf16.mxu0 0
  %320 = vmatpush1.bf16.msra.mxu0 0
  %321 = vmatprep.subr.bf16.mxu0 0
  %322 = vmatpush1.bf16.msra.mxu0 0
  %323 = vmatprep.subr.bf16.mxu0 0
  %324 = vmatpush1.bf16.msra.mxu0 0
  %325 = vmatprep.subr.bf16.mxu0 0
  %326 = vmatpush1.bf16.msra.mxu0 0
  %327 = vmatprep.subr.bf16.mxu0 0
  %328 = vmatpush1.bf16.msra.mxu0 0
  %329 = vmatprep.subr.bf16.mxu0 0
  %330 = vmatpush1.bf16.msra.mxu0 0
  %331 = vmatprep.subr.bf16.mxu0 0
  %332 = vmatpush1.bf16.msra.mxu0 0
  %333 = vmatprep.subr.bf16.mxu0 0
  %334 = vmatpush1.bf16.msra.mxu0 0
  %335 = vmatprep.mubr.bf16.mxu0 0
  %336 = vmatmul.mubr.bf16.gmra.mrb[0].mxu0 %v178
  %v337 = vpop.f32.mrb[0].mxu0
  %v338 = vadd.f32 0.0, %v337
  %v339 = vpop.f32.mrb[0].mxu0
  %v340 = vadd.f32 0.0, %v339
  %v341 = vpop.f32.mrb[0].mxu0
  %v342 = vpop.f32.mrb[0].mxu0
  %343 = vdwg.mxu0
  %vm344 = vcmp.gt.f32.partialorder %v215, 0.0
  %vm345 = vcmp.gt.f32.partialorder %v217, 0.0
  %vm346 = vcmp.gt.f32.partialorder %v256, 0.0
  %vm347 = vcmp.gt.f32.partialorder %v258, 0.0
  %vm348 = vcmp.gt.f32.partialorder %v297, 0.0
  %vm349 = vcmp.gt.f32.partialorder %v299, 0.0
  %vm350 = vcmp.gt.f32.partialorder %v338, 0.0
  %vm351 = vcmp.gt.f32.partialorder %v340, 0.0
  %v352 = vsel %vm344, 1, 0
  %v353 = vsel %vm345, 1, 0
  %v354 = vsel %vm346, 1, 0
  %v355 = vsel %vm347, 1, 0
  %v356 = vsel %vm348, 1, 0
  %v357 = vsel %vm349, 1, 0
  %v358 = vsel %vm350, 1, 0
  %v359 = vsel %vm351, 1, 0
  %v360 = vcvt.s32.f32 %v352
  %v361 = vcvt.s32.f32 %v353
  %v362 = vcvt.s32.f32 %v354
  %v363 = vcvt.s32.f32 %v355
  %v364 = vcvt.s32.f32 %v356
  %v365 = vcvt.s32.f32 %v357
  %v366 = vcvt.s32.f32 %v358
  %v367 = vcvt.s32.f32 %v359
  %vm368 = vcmask 261120
  %v370 = vsel %vm368, %v94, 0
  %372 = vmatprep.subr.mxu0 %v97
  %373 = vmatpush1.msra.mxu0 %v96
  %374 = vmatprep.subr.mxu0 %v105
  %375 = vmatpush1.msra.mxu0 %v104
  %376 = vmatprep.subr.mxu0 %v113
  %377 = vmatpush1.msra.mxu0 %v112
  %378 = vmatprep.subr.mxu0 %v121
  %379 = vmatpush1.msra.mxu0 %v120
  %380 = vmatprep.subr.mxu0 0.0
  %381 = vmatpush1.msra.mxu0 0.0
  %382 = vmatprep.subr.mxu0 0.0
  %383 = vmatpush1.msra.mxu0 0.0
  %384 = vmatprep.subr.mxu0 0.0
  %385 = vmatpush1.msra.mxu0 0.0
  %386 = vmatprep.subr.mxu0 0.0
  %387 = vmatpush1.msra.mxu0 0.0
  %388 = vmatprep.subr.mxu0 0.0
  %389 = vmatpush1.msra.mxu0 0.0
  %390 = vmatprep.subr.mxu0 0.0
  %391 = vmatpush1.msra.mxu0 0.0
  %392 = vmatprep.subr.mxu0 0.0
  %393 = vmatpush1.msra.mxu0 0.0
  %394 = vmatprep.subr.mxu0 0.0
  %395 = vmatpush1.msra.mxu0 0.0
  %396 = vmatprep.subr.mxu0 0.0
  %397 = vmatpush1.msra.mxu0 0.0
  %398 = vmatprep.subr.mxu0 0.0
  %399 = vmatpush1.msra.mxu0 0.0
  %400 = vmatprep.subr.mxu0 0.0
  %401 = vmatpush1.msra.mxu0 0.0
  %402 = vmatprep.subr.mxu0 0.0
  %403 = vmatpush1.msra.mxu0 0.0
  %404 = vmatprep.subr.mxu0 0.0
  %405 = vmatpush1.msra.mxu0 0.0
  %406 = vmatprep.subr.mxu0 0.0
  %407 = vmatpush1.msra.mxu0 0.0
  %408 = vmatprep.subr.mxu0 0.0
  %409 = vmatpush1.msra.mxu0 0.0
  %410 = vmatprep.subr.mxu0 0.0
  %411 = vmatpush1.msra.mxu0 0.0
  %412 = vmatprep.subr.mxu0 0.0
  %413 = vmatpush1.msra.mxu0 0.0
  %414 = vmatprep.subr.mxu0 0.0
  %415 = vmatpush1.msra.mxu0 0.0
  %416 = vmatprep.subr.mxu0 0.0
  %417 = vmatpush1.msra.mxu0 0.0
  %418 = vmatprep.subr.mxu0 0.0
  %419 = vmatpush1.msra.mxu0 0.0
  %420 = vmatprep.subr.mxu0 0.0
  %421 = vmatpush1.msra.mxu0 0.0
  %422 = vmatprep.subr.mxu0 0.0
  %423 = vmatpush1.msra.mxu0 0.0
  %424 = vmatprep.subr.mxu0 0.0
  %425 = vmatpush1.msra.mxu0 0.0
  %426 = vmatprep.subr.mxu0 0.0
  %427 = vmatpush1.msra.mxu0 0.0
  %428 = vmatprep.subr.mxu0 0.0
  %429 = vmatpush1.msra.mxu0 0.0
  %430 = vmatprep.subr.mxu0 0.0
  %431 = vmatpush1.msra.mxu0 0.0
  %432 = vmatprep.subr.mxu0 0.0
  %433 = vmatpush1.msra.mxu0 0.0
  %434 = vmatprep.subr.mxu0 0.0
  %435 = vmatpush1.msra.mxu0 0.0
  %436 = vmatprep.mubr.f32.mxu0 0.0
  %437 = vmatmul.mubr.f32.gmra.mrb[0].mxu0 %v370
  %v438 = vpop.f32.mrb[0].mxu0
  %v439 = vadd.f32 0.0, %v438
  %v440 = vpop.f32.mrb[0].mxu0
  %v441 = vadd.f32 0.0, %v440
  %442 = vdwg.mxu0
  %443 = vmatprep.subr.mxu0 %v99
  %444 = vmatpush1.msra.mxu0 %v98
  %445 = vmatprep.subr.mxu0 %v107
  %446 = vmatpush1.msra.mxu0 %v106
  %447 = vmatprep.subr.mxu0 %v115
  %448 = vmatpush1.msra.mxu0 %v114
  %449 = vmatprep.subr.mxu0 %v123
  %450 = vmatpush1.msra.mxu0 %v122
  %451 = vmatprep.subr.mxu0 0.0
  %452 = vmatpush1.msra.mxu0 0.0
  %453 = vmatprep.subr.mxu0 0.0
  %454 = vmatpush1.msra.mxu0 0.0
  %455 = vmatprep.subr.mxu0 0.0
  %456 = vmatpush1.msra.mxu0 0.0
  %457 = vmatprep.subr.mxu0 0.0
  %458 = vmatpush1.msra.mxu0 0.0
  %459 = vmatprep.subr.mxu0 0.0
  %460 = vmatpush1.msra.mxu0 0.0
  %461 = vmatprep.subr.mxu0 0.0
  %462 = vmatpush1.msra.mxu0 0.0
  %463 = vmatprep.subr.mxu0 0.0
  %464 = vmatpush1.msra.mxu0 0.0
  %465 = vmatprep.subr.mxu0 0.0
  %466 = vmatpush1.msra.mxu0 0.0
  %467 = vmatprep.subr.mxu0 0.0
  %468 = vmatpush1.msra.mxu0 0.0
  %469 = vmatprep.subr.mxu0 0.0
  %470 = vmatpush1.msra.mxu0 0.0
  %471 = vmatprep.subr.mxu0 0.0
  %472 = vmatpush1.msra.mxu0 0.0
  %473 = vmatprep.subr.mxu0 0.0
  %474 = vmatpush1.msra.mxu0 0.0
  %475 = vmatprep.subr.mxu0 0.0
  %476 = vmatpush1.msra.mxu0 0.0
  %477 = vmatprep.subr.mxu0 0.0
  %478 = vmatpush1.msra.mxu0 0.0
  %479 = vmatprep.subr.mxu0 0.0
  %480 = vmatpush1.msra.mxu0 0.0
  %481 = vmatprep.subr.mxu0 0.0
  %482 = vmatpush1.msra.mxu0 0.0
  %483 = vmatprep.subr.mxu0 0.0
  %484 = vmatpush1.msra.mxu0 0.0
  %485 = vmatprep.subr.mxu0 0.0
  %486 = vmatpush1.msra.mxu0 0.0
  %487 = vmatprep.subr.mxu0 0.0
  %488 = vmatpush1.msra.mxu0 0.0
  %489 = vmatprep.subr.mxu0 0.0
  %490 = vmatpush1.msra.mxu0 0.0
  %491 = vmatprep.subr.mxu0 0.0
  %492 = vmatpush1.msra.mxu0 0.0
  %493 = vmatprep.subr.mxu0 0.0
  %494 = vmatpush1.msra.mxu0 0.0
  %495 = vmatprep.subr.mxu0 0.0
  %496 = vmatpush1.msra.mxu0 0.0
  %497 = vmatprep.subr.mxu0 0.0
  %498 = vmatpush1.msra.mxu0 0.0
  %499 = vmatprep.subr.mxu0 0.0
  %500 = vmatpush1.msra.mxu0 0.0
  %501 = vmatprep.subr.mxu0 0.0
  %502 = vmatpush1.msra.mxu0 0.0
  %503 = vmatprep.subr.mxu0 0.0
  %504 = vmatpush1.msra.mxu0 0.0
  %505 = vmatprep.subr.mxu0 0.0
  %506 = vmatpush1.msra.mxu0 0.0
  %507 = vmatprep.mubr.f32.mxu0 0.0
  %508 = vmatmul.mubr.f32.gmra.mrb[0].mxu0 %v370
  %v509 = vpop.f32.mrb[0].mxu0
  %v510 = vadd.f32 0.0, %v509
  %v511 = vpop.f32.mrb[0].mxu0
  %v512 = vadd.f32 0.0, %v511
  %513 = vdwg.mxu0
  %514 = vmatprep.subr.mxu0 %v101
  %515 = vmatpush1.msra.mxu0 %v100
  %516 = vmatprep.subr.mxu0 %v109
  %517 = vmatpush1.msra.mxu0 %v108
  %518 = vmatprep.subr.mxu0 %v117
  %519 = vmatpush1.msra.mxu0 %v116
  %520 = vmatprep.subr.mxu0 %v125
  %521 = vmatpush1.msra.mxu0 %v124
  %522 = vmatprep.subr.mxu0 0.0
  %523 = vmatpush1.msra.mxu0 0.0
  %524 = vmatprep.subr.mxu0 0.0
  %525 = vmatpush1.msra.mxu0 0.0
  %526 = vmatprep.subr.mxu0 0.0
  %527 = vmatpush1.msra.mxu0 0.0
  %528 = vmatprep.subr.mxu0 0.0
  %529 = vmatpush1.msra.mxu0 0.0
  %530 = vmatprep.subr.mxu0 0.0
  %531 = vmatpush1.msra.mxu0 0.0
  %532 = vmatprep.subr.mxu0 0.0
  %533 = vmatpush1.msra.mxu0 0.0
  %534 = vmatprep.subr.mxu0 0.0
  %535 = vmatpush1.msra.mxu0 0.0
  %536 = vmatprep.subr.mxu0 0.0
  %537 = vmatpush1.msra.mxu0 0.0
  %538 = vmatprep.subr.mxu0 0.0
  %539 = vmatpush1.msra.mxu0 0.0
  %540 = vmatprep.subr.mxu0 0.0
  %541 = vmatpush1.msra.mxu0 0.0
  %542 = vmatprep.subr.mxu0 0.0
  %543 = vmatpush1.msra.mxu0 0.0
  %544 = vmatprep.subr.mxu0 0.0
  %545 = vmatpush1.msra.mxu0 0.0
  %546 = vmatprep.subr.mxu0 0.0
  %547 = vmatpush1.msra.mxu0 0.0
  %548 = vmatprep.subr.mxu0 0.0
  %549 = vmatpush1.msra.mxu0 0.0
  %550 = vmatprep.subr.mxu0 0.0
  %551 = vmatpush1.msra.mxu0 0.0
  %552 = vmatprep.subr.mxu0 0.0
  %553 = vmatpush1.msra.mxu0 0.0
  %554 = vmatprep.subr.mxu0 0.0
  %555 = vmatpush1.msra.mxu0 0.0
  %556 = vmatprep.subr.mxu0 0.0
  %557 = vmatpush1.msra.mxu0 0.0
  %558 = vmatprep.subr.mxu0 0.0
  %559 = vmatpush1.msra.mxu0 0.0
  %560 = vmatprep.subr.mxu0 0.0
  %561 = vmatpush1.msra.mxu0 0.0
  %562 = vmatprep.subr.mxu0 0.0
  %563 = vmatpush1.msra.mxu0 0.0
  %564 = vmatprep.subr.mxu0 0.0
  %565 = vmatpush1.msra.mxu0 0.0
  %566 = vmatprep.subr.mxu0 0.0
  %567 = vmatpush1.msra.mxu0 0.0
  %568 = vmatprep.subr.mxu0 0.0
  %569 = vmatpush1.msra.mxu0 0.0
  %570 = vmatprep.subr.mxu0 0.0
  %571 = vmatpush1.msra.mxu0 0.0
  %572 = vmatprep.subr.mxu0 0.0
  %573 = vmatpush1.msra.mxu0 0.0
  %574 = vmatprep.subr.mxu0 0.0
  %575 = vmatpush1.msra.mxu0 0.0
  %576 = vmatprep.subr.mxu0 0.0
  %577 = vmatpush1.msra.mxu0 0.0
  %578 = vmatprep.mubr.f32.mxu0 0.0
  %579 = vmatmul.mubr.f32.gmra.mrb[0].mxu0 %v370
  %v580 = vpop.f32.mrb[0].mxu0
  %v581 = vadd.f32 0.0, %v580
  %v582 = vpop.f32.mrb[0].mxu0
  %v583 = vadd.f32 0.0, %v582
  %584 = vdwg.mxu0
  %585 = vmatprep.subr.mxu0 %v103
  %586 = vmatpush1.msra.mxu0 %v102
  %587 = vmatprep.subr.mxu0 %v111
  %588 = vmatpush1.msra.mxu0 %v110
  %589 = vmatprep.subr.mxu0 %v119
  %590 = vmatpush1.msra.mxu0 %v118
  %591 = vmatprep.subr.mxu0 %v127
  %592 = vmatpush1.msra.mxu0 %v126
  %593 = vmatprep.subr.mxu0 0.0
  %594 = vmatpush1.msra.mxu0 0.0
  %595 = vmatprep.subr.mxu0 0.0
  %596 = vmatpush1.msra.mxu0 0.0
  %597 = vmatprep.subr.mxu0 0.0
  %598 = vmatpush1.msra.mxu0 0.0
  %599 = vmatprep.subr.mxu0 0.0
  %600 = vmatpush1.msra.mxu0 0.0
  %601 = vmatprep.subr.mxu0 0.0
  %602 = vmatpush1.msra.mxu0 0.0
  %603 = vmatprep.subr.mxu0 0.0
  %604 = vmatpush1.msra.mxu0 0.0
  %605 = vmatprep.subr.mxu0 0.0
  %606 = vmatpush1.msra.mxu0 0.0
  %607 = vmatprep.subr.mxu0 0.0
  %608 = vmatpush1.msra.mxu0 0.0
  %609 = vmatprep.subr.mxu0 0.0
  %610 = vmatpush1.msra.mxu0 0.0
  %611 = vmatprep.subr.mxu0 0.0
  %612 = vmatpush1.msra.mxu0 0.0
  %613 = vmatprep.subr.mxu0 0.0
  %614 = vmatpush1.msra.mxu0 0.0
  %615 = vmatprep.subr.mxu0 0.0
  %616 = vmatpush1.msra.mxu0 0.0
  %617 = vmatprep.subr.mxu0 0.0
  %618 = vmatpush1.msra.mxu0 0.0
  %619 = vmatprep.subr.mxu0 0.0
  %620 = vmatpush1.msra.mxu0 0.0
  %621 = vmatprep.subr.mxu0 0.0
  %622 = vmatpush1.msra.mxu0 0.0
  %623 = vmatprep.subr.mxu0 0.0
  %624 = vmatpush1.msra.mxu0 0.0
  %625 = vmatprep.subr.mxu0 0.0
  %626 = vmatpush1.msra.mxu0 0.0
  %627 = vmatprep.subr.mxu0 0.0
  %628 = vmatpush1.msra.mxu0 0.0
  %629 = vmatprep.subr.mxu0 0.0
  %630 = vmatpush1.msra.mxu0 0.0
  %631 = vmatprep.subr.mxu0 0.0
  %632 = vmatpush1.msra.mxu0 0.0
  %633 = vmatprep.subr.mxu0 0.0
  %634 = vmatpush1.msra.mxu0 0.0
  %635 = vmatprep.subr.mxu0 0.0
  %636 = vmatpush1.msra.mxu0 0.0
  %637 = vmatprep.subr.mxu0 0.0
  %638 = vmatpush1.msra.mxu0 0.0
  %639 = vmatprep.subr.mxu0 0.0
  %640 = vmatpush1.msra.mxu0 0.0
  %641 = vmatprep.subr.mxu0 0.0
  %642 = vmatpush1.msra.mxu0 0.0
  %643 = vmatprep.subr.mxu0 0.0
  %644 = vmatpush1.msra.mxu0 0.0
  %645 = vmatprep.subr.mxu0 0.0
  %646 = vmatpush1.msra.mxu0 0.0
  %647 = vmatprep.subr.mxu0 0.0
  %648 = vmatpush1.msra.mxu0 0.0
  %649 = vmatprep.mubr.f32.mxu0 0.0
  %650 = vmatmul.mubr.f32.gmra.mrb[0].mxu0 %v370
  %v651 = vpop.f32.mrb[0].mxu0
  %v652 = vadd.f32 0.0, %v651
  %v653 = vpop.f32.mrb[0].mxu0
  %v654 = vadd.f32 0.0, %v653
  %655 = vdwg.mxu0
  %v656 = vmul.f32 %v439, 0.5
  %v657 = vmul.f32 %v441, 0.5
  %v658 = vmul.f32 %v510, 0.5
  %v659 = vmul.f32 %v512, 0.5
  %v660 = vmul.f32 %v581, 0.5
  %v661 = vmul.f32 %v583, 0.5
  %v662 = vmul.f32 %v652, 0.5
  %v663 = vmul.f32 %v654, 0.5
  %v664 = vand.u32 2147483647, %v656
  %v665 = vand.u32 2147483647, %v657
  %v666 = vand.u32 2147483647, %v658
  %v667 = vand.u32 2147483647, %v659
  %v668 = vand.u32 2147483647, %v660
  %v669 = vand.u32 2147483647, %v661
  %v670 = vand.u32 2147483647, %v662
  %v671 = vand.u32 2147483647, %v663
  %v672 = vsub.f32 0.0, %v664
  %v673 = vsub.f32 0.0, %v665
  %v674 = vsub.f32 0.0, %v666
  %v675 = vsub.f32 0.0, %v667
  %v676 = vsub.f32 0.0, %v668
  %v677 = vsub.f32 0.0, %v669
  %v678 = vsub.f32 0.0, %v670
  %v679 = vsub.f32 0.0, %v671
  %v680 = vmul.f32 %v672, 1.442695
  %v681 = vpow.pop %v680
  %v682 = vmul.f32 %v673, 1.442695
  %v683 = vpow.pop %v682
  %v684 = vmul.f32 %v674, 1.442695
  %v685 = vpow.pop %v684
  %v686 = vmul.f32 %v675, 1.442695
  %v687 = vpow.pop %v686
  %v688 = vmul.f32 %v676, 1.442695
  %v689 = vpow.pop %v688
  %v690 = vmul.f32 %v677, 1.442695
  %v691 = vpow.pop %v690
  %v692 = vmul.f32 %v678, 1.442695
  %v693 = vpow.pop %v692
  %v694 = vmul.f32 %v679, 1.442695
  %v695 = vpow.pop %v694
  %v696 = vadd.f32 %v681, 1.0
  %v697 = vadd.f32 %v683, 1.0
  %v698 = vadd.f32 %v685, 1.0
  %v699 = vadd.f32 %v687, 1.0
  %v700 = vadd.f32 %v689, 1.0
  %v701 = vadd.f32 %v691, 1.0
  %v702 = vadd.f32 %v693, 1.0
  %v703 = vadd.f32 %v695, 1.0
  %v704 = vlog2.pop %v696
  %v705 = vmul.f32 %v704, 0.6931472
  %v706 = vlog2.pop %v697
  %v707 = vmul.f32 %v706, 0.6931472
  %v708 = vlog2.pop %v698
  %v709 = vmul.f32 %v708, 0.6931472
  %v710 = vlog2.pop %v699
  %v711 = vmul.f32 %v710, 0.6931472
  %v712 = vlog2.pop %v700
  %v713 = vmul.f32 %v712, 0.6931472
  %v714 = vlog2.pop %v701
  %v715 = vmul.f32 %v714, 0.6931472
  %v716 = vlog2.pop %v702
  %v717 = vmul.f32 %v716, 0.6931472
  %v718 = vlog2.pop %v703
  %v719 = vmul.f32 %v718, 0.6931472
  %v720 = vmax.f32 %v656, 0.0
  %v721 = vmax.f32 %v657, 0.0
  %v722 = vmax.f32 %v658, 0.0
  %v723 = vmax.f32 %v659, 0.0
  %v724 = vmax.f32 %v660, 0.0
  %v725 = vmax.f32 %v661, 0.0
  %v726 = vmax.f32 %v662, 0.0
  %v727 = vmax.f32 %v663, 0.0
  %v728 = vadd.f32 %v705, %v720
  %v729 = vadd.f32 %v707, %v721
  %v730 = vadd.f32 %v709, %v722
  %v731 = vadd.f32 %v711, %v723
  %v732 = vadd.f32 %v713, %v724
  %v733 = vadd.f32 %v715, %v725
  %v734 = vadd.f32 %v717, %v726
  %v735 = vadd.f32 %v719, %v727
  %v736 = vmul.f32 %v360, %v656
  %v737 = vmul.f32 %v361, %v657
  %v738 = vmul.f32 %v362, %v658
  %v739 = vmul.f32 %v363, %v659
  %v740 = vmul.f32 %v364, %v660
  %v741 = vmul.f32 %v365, %v661
  %v742 = vmul.f32 %v366, %v662
  %v743 = vmul.f32 %v367, %v663
  %v744 = vsub.f32 %v728, %v736
  %v745 = vsub.f32 %v729, %v737
  %v746 = vsub.f32 %v730, %v738
  %v747 = vsub.f32 %v731, %v739
  %v748 = vsub.f32 %v732, %v740
  %v749 = vsub.f32 %v733, %v741
  %v750 = vsub.f32 %v734, %v742
  %v751 = vsub.f32 %v735, %v743
  %s752 = sadd.s32 0, 0
  %s753 = smul.u32 %s752, 1024
  %s754 = sadd.s32 %s753, 1024
  %p755 = scmp.le.s32.totalorder %s754, 1000
  // Predicated region
  $region22: #{dpsh_loss.1} parent=0 // pred_check
    %p756 = pneg %p755
  $region23: #{dpsh_loss.1} parent=0 // pred_check_branch
    %758 = sbr.rel (%p756) target = $region25
  $region24: #{dpsh_loss.1} parent=0 // pred_region
    %v759 = vld [vmem:[%s4] sm:$0xff]
    %v760 = vld [vmem:[%s4 + $0x8] sm:$0xff]
    %v761 = vld [vmem:[%s4 + $0x10] sm:$0xff]
    %v762 = vld [vmem:[%s4 + $0x18] sm:$0xff]
    %v763 = vld [vmem:[%s4 + $0x20] sm:$0xff]
    %v764 = vld [vmem:[%s4 + $0x28] sm:$0xff]
    %v765 = vld [vmem:[%s4 + $0x30] sm:$0xff]
    %v766 = vld [vmem:[%s4 + $0x38] sm:$0xff]
    %v767 = vadd.f32 %v759, %v744
    %v768 = vadd.f32 %v760, %v745
    %v769 = vadd.f32 %v761, %v746
    %v770 = vadd.f32 %v762, %v747
    %v771 = vadd.f32 %v763, %v748
    %v772 = vadd.f32 %v764, %v749
    %v773 = vadd.f32 %v765, %v750
    %v774 = vadd.f32 %v766, %v751
    %775 = vst [vmem:[%s4] sm:$0xff] %v767
    %776 = vst [vmem:[%s4 + $0x8] sm:$0xff] %v768
    %777 = vst [vmem:[%s4 + $0x10] sm:$0xff] %v769
    %778 = vst [vmem:[%s4 + $0x18] sm:$0xff] %v770
    %779 = vst [vmem:[%s4 + $0x20] sm:$0xff] %v771
    %780 = vst [vmem:[%s4 + $0x28] sm:$0xff] %v772
    %781 = vst [vmem:[%s4 + $0x30] sm:$0xff] %v773
    %782 = vst [vmem:[%s4 + $0x38] sm:$0xff] %v774
  $region25: #{dpsh_loss.1} parent=0 // pred_fallthru
    _
  %p783 = scmp.gt.s32.totalorder %s754, 1000
  // Predicated region
  $region26: #{dpsh_loss.1} parent=0 // pred_check
    %p784 = pneg %p783
  $region27: #{dpsh_loss.1} parent=0 // pred_check_branch
    %786 = sbr.rel (%p784) target = $region29
  $region28: #{dpsh_loss.1} parent=0 // pred_region
    %v787 = vlaneseq
    %v788 = vand.u32 %v787, 127
    %v789 = vadd.s32 %v788, 128
    %v790 = vadd.s32 %v788, 256
    %v791 = vadd.s32 %v788, 384
    %v792 = vadd.s32 %v788, 512
    %v793 = vadd.s32 %v788, 640
    %v794 = vadd.s32 %v788, 768
    %v795 = vadd.s32 %v788, 896
    %v796 = vstv %s753
    %v797 = vadd.s32 %v796, %v788
    %v798 = vadd.s32 %v796, %v789
    %v799 = vadd.s32 %v796, %v790
    %v800 = vadd.s32 %v796, %v791
    %v801 = vadd.s32 %v796, %v792
    %v802 = vadd.s32 %v796, %v793
    %v803 = vadd.s32 %v796, %v794
    %v804 = vadd.s32 %v796, %v795
    %v805 = vld [vmem:[%s4] sm:$0xff]
    %v806 = vld [vmem:[%s4 + $0x8] sm:$0xff]
    %v807 = vld [vmem:[%s4 + $0x10] sm:$0xff]
    %v808 = vld [vmem:[%s4 + $0x18] sm:$0xff]
    %v809 = vld [vmem:[%s4 + $0x20] sm:$0xff]
    %v810 = vld [vmem:[%s4 + $0x28] sm:$0xff]
    %v811 = vld [vmem:[%s4 + $0x30] sm:$0xff]
    %v812 = vld [vmem:[%s4 + $0x38] sm:$0xff]
    %vm813 = vcmp.lt.s32.totalorder %v797, 1000
    %vm814 = vcmp.lt.s32.totalorder %v798, 1000
    %vm815 = vcmp.lt.s32.totalorder %v799, 1000
    %vm816 = vcmp.lt.s32.totalorder %v800, 1000
    %vm817 = vcmp.lt.s32.totalorder %v801, 1000
    %vm818 = vcmp.lt.s32.totalorder %v802, 1000
    %vm819 = vcmp.lt.s32.totalorder %v803, 1000
    %vm820 = vcmp.lt.s32.totalorder %v804, 1000
    %v821 = vsel %vm813, %v744, 0.0
    %v822 = vsel %vm814, %v745, 0.0
    %v823 = vsel %vm815, %v746, 0.0
    %v824 = vsel %vm816, %v747, 0.0
    %v825 = vsel %vm817, %v748, 0.0
    %v826 = vsel %vm818, %v749, 0.0
    %v827 = vsel %vm819, %v750, 0.0
    %v828 = vsel %vm820, %v751, 0.0
    %v829 = vadd.f32 %v805, %v821
    %v830 = vadd.f32 %v806, %v822
    %v831 = vadd.f32 %v807, %v823
    %v832 = vadd.f32 %v808, %v824
    %v833 = vadd.f32 %v809, %v825
    %v834 = vadd.f32 %v810, %v826
    %v835 = vadd.f32 %v811, %v827
    %v836 = vadd.f32 %v812, %v828
    %837 = vst [vmem:[%s4] sm:$0xff] %v829
    %838 = vst [vmem:[%s4 + $0x8] sm:$0xff] %v830
    %839 = vst [vmem:[%s4 + $0x10] sm:$0xff] %v831
    %840 = vst [vmem:[%s4 + $0x18] sm:$0xff] %v832
    %841 = vst [vmem:[%s4 + $0x20] sm:$0xff] %v833
    %842 = vst [vmem:[%s4 + $0x28] sm:$0xff] %v834
    %843 = vst [vmem:[%s4 + $0x30] sm:$0xff] %v835
    %844 = vst [vmem:[%s4 + $0x38] sm:$0xff] %v836
  $region29: #{dpsh_loss.1} parent=0 // pred_fallthru
    _
  // Predicated region
  $region30: #{dpsh_loss.1} parent=0 // pred_check
    _
  $region31: #{dpsh_loss.1} parent=0 // pred_check_branch
    %846 = sbr.rel (0) target = $region33
  $region32: #{dpsh_loss.1} parent=0 // pred_region
    _
  $region33: #{dpsh_loss.1} parent=0 // pred_fallthru
    _
  // Predicated region
  $region34: #{dpsh_loss.1} parent=0 // pred_check
    _
  $region35: #{dpsh_loss.1} parent=0 // pred_check_branch
    %848 = sbr.rel (0) target = $region37
  $region36: #{dpsh_loss.1} parent=0 // pred_region
    _
  $region37: #{dpsh_loss.1} parent=0 // pred_fallthru
    _

</llo_original>
